<compile_context>
chip_gen: v7x
topology: tpu7x:2x2x1
jax: 0.10.0
libtpu: 0.0.40
codegen_flags: <defaults>
</compile_context>

<pallas_src>
import functools

import jax
import jax.numpy as jnp
from jax import lax
from jax.experimental import pallas as pl
from jax.experimental.pallas import tpu as pltpu


# ----------------------------------------------------------------------------
# Kernel: GroupNorm (affine=False) + time modulation, one (batch, chunk) / step
# ----------------------------------------------------------------------------
def _gn_mod_kernel(m_ref, mod_ref, x_ref, o_ref, *, eps):
    """One chunk of whole groups for one batch element.

    m_ref   : (Cc, Cc)  block-diagonal group-averaging matrix (resident; the
                        same block pattern holds for every chunk)
    mod_ref : (Cc, 2)   column 0 = (1 + scale), column 1 = shift
    x_ref   : (Cc, HW)  input chunk (channels on sublanes, spatial on lanes)
    o_ref   : (Cc, HW)  output chunk
    """
    x = x_ref[...].astype(jnp.float32)                        # (Cc, HW)

    # Single-pass statistics: per-channel sum / sum-of-squares (lane reduce),
    # then ONE tiny MXU matmul turns both into per-channel group mean and
    # E[x^2] (M carries the 1/(cpg*HW) factor).
    ch_sum = jnp.sum(x, axis=-1, keepdims=True)               # (Cc, 1)
    ch_sumsq = jnp.sum(x * x, axis=-1, keepdims=True)         # (Cc, 1)
    stats = jnp.concatenate([ch_sum, ch_sumsq], axis=-1)      # (Cc, 2)
    g = jnp.dot(m_ref[...], stats, preferred_element_type=jnp.float32)
    mean, ex2 = g[:, 0:1], g[:, 1:2]                          # (Cc, 1) each

    # Clamp: E[x^2] - mean^2 can go slightly negative from f32 cancellation.
    var = jnp.maximum(ex2 - mean * mean, 0.0)
    inv = lax.rsqrt(var + eps)                                # (Cc, 1)

    # Fold normalization + modulation into one FMA over the chunk:
    #   y = (x - mean) * inv * (1 + scale) + shift = x * a + bias
    mod = mod_ref[...].astype(jnp.float32)                    # (Cc, 2)
    a = inv * mod[:, 0:1]                                     # inv * (1 + scale)
    bias = mod[:, 1:2] - mean * a                             # shift - mean * a
    o_ref[...] = (x * a + bias).astype(o_ref.dtype)


# ----------------------------------------------------------------------------
# Block sizing helpers
# ----------------------------------------------------------------------------
def _vmem_limit_bytes():
    """Scoped VMEM limit sized from the actual chip (v7x: 64 MiB, v5e/v6e: 128)."""
    cap = 64 << 20  # conservative default = v7x per-TC VMEM
    try:
        info = pltpu.get_tpu_info()
        c = getattr(info, "vmem_capacity_bytes", None)
        if c:
            cap = int(c)
    except Exception:
        pass
    return (cap * 3) // 4  # leave headroom for compiler-internal scratch


def _pick_chunk_channels(C, cpg, HW, itemsize, budget_bytes):
    """Largest chunk of whole groups (<=256 ch preferred) whose double-buffered
    in/out tiles + residents fit the VMEM budget. Chunk must be a multiple of
    the sublane tile (or the full C) so the BlockSpec is legal."""
    sub = {4: 8, 2: 16, 1: 32}.get(itemsize, 8)
    cands = []
    for k in range(1, C // cpg + 1):
        cc = k * cpg
        if C % cc:
            continue
        if cc != C and cc % sub:
            continue
        cands.append(cc)
    if not cands:
        cands = [C]

    def step_bytes(cc):
        io = 2 * cc * HW * (itemsize + itemsize)   # dbl-buffered in + out tiles
        work = cc * HW * 4                         # one f32 working copy
        resid = 2 * cc * cc * 4 + 2 * cc * 2 * 4   # M + (scale,shift)
        return io + work + resid

    fitting = [cc for cc in cands if step_bytes(cc) <= budget_bytes]
    if not fitting:
        # TODO(synk): add an "arbitrary" HW-splitting grid axis with partial-sum
        # scratch for spatial sizes where even one group per step overflows VMEM.
        return cands[0]
    pref = [cc for cc in fitting if cc <= 256]
    return pref[-1] if pref else fitting[0]


# ----------------------------------------------------------------------------
# GroupNorm + modulation wrapper
# ----------------------------------------------------------------------------
def group_norm_modulate(x, scale_mul, shift, groups, eps=1e-5):
    B, C, H, W = x.shape
    assert C % groups == 0
    cpg = C // groups
    HW = H * W
    x_flat = x.reshape(B, C, HW)

    itemsize = jnp.dtype(x.dtype).itemsize
    vmem_limit = _vmem_limit_bytes()
    Cc = _pick_chunk_channels(C, cpg, HW, itemsize, vmem_limit - (2 << 20))
    n_chunks = C // Cc

    # Block-diagonal averaging matrix for ONE chunk (identical for every chunk
    # since each chunk owns whole groups): M[i,j] = 1/(cpg*HW) if same group.
    ch = jnp.arange(Cc)
    same_group = (ch[:, None] // cpg) == (ch[None, :] // cpg)
    M = jnp.where(same_group, 1.0 / float(cpg * HW), 0.0).astype(jnp.float32)

    # Merged modulation params: [..., 0] = 1 + scale, [..., 1] = shift.
    mod = jnp.stack([scale_mul, shift], axis=-1).astype(jnp.float32)  # (B, C, 2)

    kernel = functools.partial(_gn_mod_kernel, eps=float(eps))

    out = pl.pallas_call(
        kernel,
        out_shape=jax.ShapeDtypeStruct((B, C, HW), x.dtype),
        grid=(B, n_chunks),
        in_specs=[
            pl.BlockSpec((Cc, Cc), lambda b, c: (0, 0)),           # M, resident
            pl.BlockSpec((None, Cc, 2), lambda b, c: (b, c, 0)),   # (1+scale, shift)
            pl.BlockSpec((None, Cc, HW), lambda b, c: (b, c, 0)),  # x chunk
        ],
        out_specs=pl.BlockSpec((None, Cc, HW), lambda b, c: (b, c, 0)),
        compiler_params=pltpu.CompilerParams(
            dimension_semantics=("parallel", "parallel"),
            vmem_limit_bytes=int(vmem_limit),
        ),
    )(M, mod, x_flat)

    return out.reshape(B, C, H, W)


# ----------------------------------------------------------------------------
# Full module forward
# ----------------------------------------------------------------------------
def time_aware_group_norm(x, t_emb, w, b, groups=8, eps=1e-5):
    B, C, H, W = x.shape
    # Time MLP: silu(t_emb) @ W.T + b in plain XLA (too small to be a kernel);
    # contract on T directly (no transposed copy of W) and fold the "1 +" here.
    h = t_emb * jax.nn.sigmoid(t_emb)                          # SiLU
    out = lax.dot_general(h, w, (((1,), (1,)), ((), ()))) + b  # (B, 2C)
    scale_mul = 1.0 + out[:, :C]
    shift = out[:, C:]
    return group_norm_modulate(x, scale_mul, shift, groups, eps)


# Pure-JAX reference for a numerical sanity check.
def _reference(x, t_emb, w, b, groups=8, eps=1e-5):
    B, C, H, W = x.shape
    h = t_emb * jax.nn.sigmoid(t_emb)
    out = h @ w.T + b
    scale, shift = out[:, :C], out[:, C:]
    xg = x.reshape(B, groups, C // groups, H, W)
    mean = xg.mean(axis=(2, 3, 4), keepdims=True)
    var = xg.var(axis=(2, 3, 4), keepdims=True)
    xn = ((xg - mean) * lax.rsqrt(var + eps)).reshape(B, C, H, W)
    return xn * (1 + scale[:, :, None, None]) + shift[:, :, None, None]


if __name__ == "__main__":
    B, C, H, W = 2, 16, 16, 16
    TIME_DIM, GROUPS = 32, 8

    key = jax.random.PRNGKey(0)
    kx, kt, kw, kb = jax.random.split(key, 4)

    x = jax.random.normal(kx, (B, C, H, W), dtype=jnp.float32)
    t_emb = jax.random.normal(kt, (B, TIME_DIM), dtype=jnp.float32)

    # nn.Linear(time_dim, 2*channels) default init: U(-1/sqrt(fan_in), 1/sqrt(fan_in))
    bound = 1.0 / (TIME_DIM ** 0.5)
    w = jax.random.uniform(kw, (2 * C, TIME_DIM), jnp.float32, -bound, bound)
    b = jax.random.uniform(kb, (2 * C,), jnp.float32, -bound, bound)

    out = time_aware_group_norm(x, t_emb, w, b, groups=GROUPS)
    out = jax.block_until_ready(out)

    ref = _reference(x, t_emb, w, b, groups=GROUPS)
    assert out.shape == (B, C, H, W)
    assert jnp.allclose(out, ref, rtol=2e-3, atol=2e-3), "mismatch vs reference"

    print("KERNEL_OK")
</pallas_src>

<mosaic_0001>
module attributes {stable_mosaic.version = 11 : i64} {
  func.func @_gn_mod_kernel(%arg0: i32, %arg1: i32, %arg2: memref<16x16xf32, #tpu.memory_space<vmem>>, %arg3: memref<1x16x2xf32, #tpu.memory_space<vmem>>, %arg4: memref<1x16x256xf32, #tpu.memory_space<vmem>>, %arg5: memref<1x16x256xf32, #tpu.memory_space<vmem>>) attributes {dimension_semantics = [#tpu.dimension_semantics<parallel>, #tpu.dimension_semantics<parallel>], iteration_bounds = array<i64: 2, 1>, scalar_prefetch = 0 : i64, scratch_operands = 0 : i64, tpu.core_type = #tpu.core_type<tc>, window_params = [{pipeline_mode = #tpu.pipeline_mode<synchronous>, transform_indices = @transform_0, window_bounds = array<i64: 16, 16>}, {transform_indices = @transform_1, window_bounds = array<i64: 1, 16, 2>}, {transform_indices = @transform_2, window_bounds = array<i64: 1, 16, 256>}, {transform_indices = @transform_3, window_bounds = array<i64: 1, 16, 256>}]} {
    %c0 = arith.constant 0 : index
    %c0_0 = arith.constant 0 : index
    %c0_1 = arith.constant 0 : index
    %0 = vector.load %arg4[%c0, %c0_0, %c0_1] : memref<1x16x256xf32, #tpu.memory_space<vmem>>, vector<1x16x256xf32>
    %1 = vector.shape_cast %0 : vector<1x16x256xf32> to vector<16x256xf32>
    %cst = arith.constant dense<0.000000e+00> : vector<16xf32>
    %2 = vector.multi_reduction <add>, %1, %cst [1] : vector<16x256xf32> to vector<16xf32>
    %3 = vector.shape_cast %2 : vector<16xf32> to vector<16x1xf32>
    %4 = arith.mulf %1, %1 : vector<16x256xf32>
    %cst_2 = arith.constant dense<0.000000e+00> : vector<16xf32>
    %5 = vector.multi_reduction <add>, %4, %cst_2 [1] : vector<16x256xf32> to vector<16xf32>
    %6 = vector.shape_cast %5 : vector<16xf32> to vector<16x1xf32>
    %7 = tpu.concatenate %3, %6 in 1 : vector<16x1xf32>, vector<16x1xf32> -> vector<16x2xf32>
    %c0_3 = arith.constant 0 : index
    %c0_4 = arith.constant 0 : index
    %8 = vector.load %arg2[%c0_3, %c0_4] : memref<16x16xf32, #tpu.memory_space<vmem>>, vector<16x16xf32>
    %cst_5 = arith.constant dense<0.000000e+00> : vector<16x2xf32>
    %9 = tpu.matmul %8, %7, %cst_5 {dimension_numbers = #tpu.dot_dimension_numbers<[1], [0], [0], [1], [0, 0, 1, 1], [], []>} : vector<16x16xf32>, vector<16x2xf32>, vector<16x2xf32> -> vector<16x2xf32>
    %10 = vector.extract_strided_slice %9 {offsets = [0, 0], sizes = [16, 1], strides = [1, 1]} : vector<16x2xf32> to vector<16x1xf32>
    %11 = vector.extract_strided_slice %9 {offsets = [0, 1], sizes = [16, 1], strides = [1, 1]} : vector<16x2xf32> to vector<16x1xf32>
    %12 = arith.mulf %10, %10 : vector<16x1xf32>
    %13 = arith.subf %11, %12 : vector<16x1xf32>
    %cst_6 = arith.constant 0.000000e+00 : f32
    %14 = vector.broadcast %cst_6 : f32 to vector<16x1xf32>
    %15 = arith.maximumf %13, %14 : vector<16x1xf32>
    %cst_7 = arith.constant 9.99999974E-6 : f32
    %16 = vector.broadcast %cst_7 : f32 to vector<16x1xf32>
    %17 = arith.addf %15, %16 : vector<16x1xf32>
    %18 = math.rsqrt %17 : vector<16x1xf32>
    %c0_8 = arith.constant 0 : index
    %c0_9 = arith.constant 0 : index
    %c0_10 = arith.constant 0 : index
    %19 = vector.load %arg3[%c0_8, %c0_9, %c0_10] : memref<1x16x2xf32, #tpu.memory_space<vmem>>, vector<1x16x2xf32>
    %20 = vector.shape_cast %19 : vector<1x16x2xf32> to vector<16x2xf32>
    %21 = vector.extract_strided_slice %20 {offsets = [0, 0], sizes = [16, 1], strides = [1, 1]} : vector<16x2xf32> to vector<16x1xf32>
    %22 = arith.mulf %18, %21 : vector<16x1xf32>
    %23 = vector.extract_strided_slice %20 {offsets = [0, 1], sizes = [16, 1], strides = [1, 1]} : vector<16x2xf32> to vector<16x1xf32>
    %24 = arith.mulf %10, %22 : vector<16x1xf32>
    %25 = arith.subf %23, %24 : vector<16x1xf32>
    %26 = vector.broadcast %22 : vector<16x1xf32> to vector<16x256xf32>
    %27 = arith.mulf %1, %26 : vector<16x256xf32>
    %28 = vector.broadcast %25 : vector<16x1xf32> to vector<16x256xf32>
    %29 = arith.addf %27, %28 : vector<16x256xf32>
    %c0_11 = arith.constant 0 : index
    %c0_12 = arith.constant 0 : index
    %c0_13 = arith.constant 0 : index
    %30 = vector.load %arg5[%c0_11, %c0_12, %c0_13] : memref<1x16x256xf32, #tpu.memory_space<vmem>>, vector<1x16x256xf32>
    %31 = vector.shape_cast %30 : vector<1x16x256xf32> to vector<16x256xf32>
    %32 = vector.shape_cast %29 : vector<16x256xf32> to vector<1x16x256xf32>
    tpu.vector_store %arg5[%c0_11, %c0_12, %c0_13], %32 {strides = array<i32>} : memref<1x16x256xf32, #tpu.memory_space<vmem>>, vector<1x16x256xf32>,
    return
  }
  func.func @transform_0(%arg0: i32, %arg1: i32) -> (i32, i32) {
    %c0_i32 = arith.constant 0 : i32
    %c0_i32_0 = arith.constant 0 : i32
    %c0_i32_1 = arith.constant 0 : i32
    return %c0_i32, %c0_i32_0 : i32, i32
  }
  func.func @transform_1(%arg0: i32, %arg1: i32) -> (i32, i32, i32) {
    %c0_i32 = arith.constant 0 : i32
    %c0_i32_0 = arith.constant 0 : i32
    return %arg0, %arg1, %c0_i32 : i32, i32, i32
  }
  func.func @transform_2(%arg0: i32, %arg1: i32) -> (i32, i32, i32) {
    %c0_i32 = arith.constant 0 : i32
    %c0_i32_0 = arith.constant 0 : i32
    return %arg0, %arg1, %c0_i32 : i32, i32, i32
  }
  func.func @transform_3(%arg0: i32, %arg1: i32) -> (i32, i32, i32) {
    %c0_i32 = arith.constant 0 : i32
    %c0_i32_0 = arith.constant 0 : i32
    return %arg0, %arg1, %c0_i32 : i32, i32, i32
  }
}

</mosaic_0001>

<llo_original>
// kernel: tpu_custom_call.1
$region0: #{tpu_custom_call.1}
  #allocation0 [shape = 'u32[]', space=smem, size = 0x4, offset = 0x4, fixed_abs, tag = 'smem constant byte address 0x4 - core index']
  #allocation1 [shape = 'u32[144,128]{1,0:T(1,128)}', space=vmem, size = 0x12000, scoped, tag = 'internal scratch']
  %s0 = inlined_call_operand.vmem [shape: f32[16,16], index: 0, kind: input, shape index: {}]
  %s1 = inlined_call_operand.vmem [shape: f32[2,16,2], index: 1, kind: input, shape index: {}]
  %s2 = inlined_call_operand.hbm [shape: f32[2,16,256], index: 2, kind: input, shape index: {}]
  %s3 = inlined_call_operand.hbm [shape: f32[2,16,256], index: 3, kind: output, shape index: {}]
  %s4 = sld [smem:[#allocation0]]
  $region49: #{tpu_custom_call.1} parent=0
    _
  %s6 = ssub.s32 1, %s4
  %s7 = scalar_select 0, %s6, %s4
  $region1: #{tpu_custom_call.1} parent=0
    #allocation2 [shape = 'u8[32768]{0}', space=vmem, size = 0x8000, scoped, tag = 'input window, operand 2']
    #allocation3 [shape = 's32[2]{0}', space=sflag, size = 0x8, scoped, tag = 'scoped memory for tpu_custom_call.1']
    #allocation4 [shape = 's32[2]{0}', space=sflag, size = 0x8, scoped, tag = 'scoped memory for tpu_custom_call.1']
    #allocation5 [shape = 'u8[32768]{0}', space=vmem, size = 0x8000, scoped, tag = 'output window, operand 0']
    %8 = vsyncpa [#allocation3], 0
    %s9 = scalar_lea.sflag [#allocation3], 1
    %10 = vsyncpa %s9, 0
    %11 = vsyncpa [#allocation4], 0
    %s12 = scalar_lea.sflag [#allocation4], 1
    %13 = vsyncpa %s12, 0
    loop: start=0, step=1, limit=4
    $region2: #{tpu_custom_call.1} parent=1 // loop_pre_header
      _
    $region3: #{tpu_custom_call.1} parent=1 // loop_header
      %s15 = sphi 0, %s19
      %p16 = scmp.ge.s32.totalorder %s15, 4
      %s22 = sphi 0, %s34
      %s23 = sphi 0, %s30
      %s24 = sphi 0, %s22
      %s25 = sphi 0, %s23
      %s26 = sphi 0, %s24
      %s27 = sphi 0, %s25
      %s35 = sphi 0, %s35
      %s37 = sphi 0, %s35
      %s38 = sphi 0, %s37
      %s52 = sphi 0, %s38
      %s60 = sphi 0, %s62
      %s63 = sphi 0, %s60
      %s64 = sphi 0, %s63
      %s80 = sphi 0, %s64
      %s88 = sphi 0, %s90
      %s91 = sphi 0, %s88
      %s92 = sphi 0, %s91
      %s108 = sphi 0, %s92
      %s116 = sphi 0, %s118
      %s119 = sphi 0, %s116
      %s120 = sphi 0, %s119
      %s136 = sphi 0, %s120
    $region4: #{tpu_custom_call.1} parent=1 // loop_header_branch
      %18 = sbr.rel (%p16) target = $region8
    $region5: #{tpu_custom_call.1} parent=1 // loop_body
      %s20 = ssub.s32 %s15, 1
      %s21 = ssub.s32 %s15, 2
      %s28 = sadd.s32 1, %s23
      %p29 = scmp.ge.s32.totalorder %s28, 1
      %s30 = scalar_select %p29, 0, %s28
      %s31 = sadd.s32 1, %s22
      %s32 = scalar_select %p29, %s31, %s22
      %p33 = scmp.ge.s32.totalorder %s32, 2
      %s34 = scalar_select %p33, 0, %s32
      %s36 = sadd.s32 %s35, 1
      %p39 = scmp.eq.s32.totalorder %s15, 1
      %p40 = scmp.ne.s32.totalorder %s35, %s37
      %p41 = scmp.eq.s32.totalorder %s15, 0
      %p42 = por %p40, %p41
      %p43 = scmp.ne.s32.totalorder %s35, %s37
      %p44 = scmp.eq.s32.totalorder %s20, 1
      %p45 = por %p43, %p44
      %p46 = scmp.ne.s32.totalorder %s37, %s38
      %p47 = scmp.eq.s32.totalorder %s20, 0
      %p48 = por %p46, %p47
      %p49 = scmp.ne.s32.totalorder %s37, %s38
      %p50 = scmp.eq.s32.totalorder %s21, 1
      %p51 = por %p49, %p50
      %p53 = scmp.ne.s32.totalorder %s38, %s52
      %p54 = scmp.eq.s32.totalorder %s21, 0
      %p55 = por %p53, %p54
      %s56 = ssub.s32 %s22, %s34
      %s57 = ssub.s32 %s23, %s30
      %s58 = sor.u32 %s56, %s57
      %p59 = scmp.eq.s32.totalorder %s58, 0
      %s61 = sadd.s32 %s60, 1
      %s62 = scalar_select %p59, %s60, %s61
      %p65 = pneg %p59
      %p66 = scmp.eq.s32.totalorder %s15, 1
      %p67 = por %p65, %p66
      %p68 = scmp.ne.s32.totalorder %s60, %s63
      %p69 = scmp.eq.s32.totalorder %s15, 0
      %p70 = por %p68, %p69
      %p71 = scmp.ne.s32.totalorder %s60, %s63
      %p72 = scmp.eq.s32.totalorder %s20, 1
      %p73 = por %p71, %p72
      %p74 = scmp.ne.s32.totalorder %s63, %s64
      %p75 = scmp.eq.s32.totalorder %s20, 0
      %p76 = por %p74, %p75
      %p77 = scmp.ne.s32.totalorder %s63, %s64
      %p78 = scmp.eq.s32.totalorder %s21, 1
      %p79 = por %p77, %p78
      %p81 = scmp.ne.s32.totalorder %s64, %s80
      %p82 = scmp.eq.s32.totalorder %s21, 0
      %p83 = por %p81, %p82
      %s84 = ssub.s32 %s22, %s34
      %s85 = ssub.s32 %s23, %s30
      %s86 = sor.u32 %s84, %s85
      %p87 = scmp.eq.s32.totalorder %s86, 0
      %s89 = sadd.s32 %s88, 1
      %s90 = scalar_select %p87, %s88, %s89
      %p93 = pneg %p87
      %p94 = scmp.eq.s32.totalorder %s15, 1
      %p95 = por %p93, %p94
      %p96 = scmp.ne.s32.totalorder %s88, %s91
      %p97 = scmp.eq.s32.totalorder %s15, 0
      %p98 = por %p96, %p97
      %p99 = scmp.ne.s32.totalorder %s88, %s91
      %p100 = scmp.eq.s32.totalorder %s20, 1
      %p101 = por %p99, %p100
      %p102 = scmp.ne.s32.totalorder %s91, %s92
      %p103 = scmp.eq.s32.totalorder %s20, 0
      %p104 = por %p102, %p103
      %p105 = scmp.ne.s32.totalorder %s91, %s92
      %p106 = scmp.eq.s32.totalorder %s21, 1
      %p107 = por %p105, %p106
      %p109 = scmp.ne.s32.totalorder %s92, %s108
      %p110 = scmp.eq.s32.totalorder %s21, 0
      %p111 = por %p109, %p110
      %s112 = ssub.s32 %s22, %s34
      %s113 = ssub.s32 %s23, %s30
      %s114 = sor.u32 %s112, %s113
      %p115 = scmp.eq.s32.totalorder %s114, 0
      %s117 = sadd.s32 %s116, 1
      %s118 = scalar_select %p115, %s116, %s117
      %p121 = pneg %p115
      %p122 = scmp.eq.s32.totalorder %s15, 1
      %p123 = por %p121, %p122
      %p124 = scmp.ne.s32.totalorder %s116, %s119
      %p125 = scmp.eq.s32.totalorder %s15, 0
      %p126 = por %p124, %p125
      %p127 = scmp.ne.s32.totalorder %s116, %s119
      %p128 = scmp.eq.s32.totalorder %s20, 1
      %p129 = por %p127, %p128
      %p130 = scmp.ne.s32.totalorder %s119, %s120
      %p131 = scmp.eq.s32.totalorder %s20, 0
      %p132 = por %p130, %p131
      %p133 = scmp.ne.s32.totalorder %s119, %s120
      %p134 = scmp.eq.s32.totalorder %s21, 1
      %p135 = por %p133, %p134
      %p137 = scmp.ne.s32.totalorder %s120, %s136
      %p138 = scmp.eq.s32.totalorder %s21, 0
      %p139 = por %p137, %p138
      %p140 = scmp.le.s32.totalorder 1, %s15
      %p141 = scmp.lt.s32.totalorder %s15, 3
      %p142 = pnand %p140, %p141
      %p143 = pneg %p142
      // Predicated region
      $region9: #{tpu_custom_call.1} parent=5 // pred_check
        _
      $region10: #{tpu_custom_call.1} parent=5 // pred_check_branch
        %145 = sbr.rel (%p142) target = $region12
      $region11: #{tpu_custom_call.1} parent=5 // pred_region
        %s146 = ssub.s32 %s15, 1
        // Predicated region
        $region13: #{tpu_custom_call.1} parent=11 // pred_check
          %p147 = pneg %p48
        $region14: #{tpu_custom_call.1} parent=11 // pred_check_branch
          %149 = sbr.rel (%p147) target = $region16
        $region15: #{tpu_custom_call.1} parent=11 // pred_region
          _
        $region16: #{tpu_custom_call.1} parent=11 // pred_fallthru
          _
      $region12: #{tpu_custom_call.1} parent=5 // pred_fallthru
        _
      %p150 = scmp.lt.s32.totalorder %s15, 2
      // Predicated region
      $region17: #{tpu_custom_call.1} parent=5 // pred_check
        %p151 = pneg %p150
      $region18: #{tpu_custom_call.1} parent=5 // pred_check_branch
        %153 = sbr.rel (%p151) target = $region20
      $region19: #{tpu_custom_call.1} parent=5 // pred_region
        // Predicated region
        $region21: #{tpu_custom_call.1} parent=19 // pred_check
          %p154 = pneg %p70
        $region22: #{tpu_custom_call.1} parent=19 // pred_check_branch
          %156 = sbr.rel (%p154) target = $region24
        $region23: #{tpu_custom_call.1} parent=19 // pred_region
          %s157 = smul.u32 2, %s23
          %p158 = scmp.lt.s32.totalorder %s22, 1
          %s159 = scalar_select %p158, %s22, 1
          %p160 = scmp.lt.s32.totalorder %s157, 1
          %s161 = scalar_select %p160, %s157, 1
          %s162 = smul.addr %s159, 2
          %s163 = sadd.s32 %s161, %s162
          %s164 = smul.addr %s163, 8
          %s165 = scalar_lea.vmem %s1, %s164
          %s166 = smul.u32 2, %s23
        $region24: #{tpu_custom_call.1} parent=19 // pred_fallthru
          _
        // Predicated region
        $region25: #{tpu_custom_call.1} parent=19 // pred_check
          %p167 = pneg %p98
        $region26: #{tpu_custom_call.1} parent=19 // pred_check_branch
          %169 = sbr.rel (%p167) target = $region28
        $region27: #{tpu_custom_call.1} parent=19 // pred_region
          %s170 = sand.u32 %s88, 1
          %s171 = scalar_lea.sflag [#allocation3], %s170
          %s172 = sand.u32 %s88, 1
          %s173 = smul.addr %s172, 32
          %s174 = scalar_lea.vmem [#allocation2], %s173
          %s175 = smul.u32 2, %s23
          %s177 = ssub.s32 512, 512
          %178 = vsyncadd %s171, %s177
          %s179 = smul.addr %s175, 2
          %s180 = smul.addr %s22, 4
          %s181 = sadd.s32 %s179, %s180
          %s182 = smul.addr %s181, 128
          %s183 = scalar_lea.hbm %s2, %s182
          %s184 = sshll.u32 %s174, 4
          %s185 = int_to_ptr.vmem [resolvable:$true] %s184
          %190 = dma.hbm_to_vmem [thread:$0]  %s183, 512, %s185, %s171, 256, 256, 16
        $region28: #{tpu_custom_call.1} parent=19 // pred_fallthru
          _
      $region20: #{tpu_custom_call.1} parent=5 // pred_fallthru
        _
      %p191 = scmp.le.s32.totalorder 1, %s15
      %p192 = scmp.lt.s32.totalorder %s15, 3
      %p193 = pnand %p191, %p192
      %p194 = pneg %p193
      // Predicated region
      $region29: #{tpu_custom_call.1} parent=5 // pred_check
        _
      $region30: #{tpu_custom_call.1} parent=5 // pred_check_branch
        %196 = sbr.rel (%p193) target = $region32
      $region31: #{tpu_custom_call.1} parent=5 // pred_region
        %s197 = ssub.s32 %s15, 1
        %s198 = sand.u32 %s91, 1
        %s199 = scalar_lea.sflag [#allocation3], %s198
        %s200 = sand.u32 %s91, 1
        %s201 = smul.addr %s200, 32
        %s202 = scalar_lea.vmem [#allocation2], %s201
        // Predicated region
        $region33: #{tpu_custom_call.1} parent=31 // pred_check
          %p203 = pneg %p104
        $region34: #{tpu_custom_call.1} parent=31 // pred_check_branch
          %205 = sbr.rel (%p203) target = $region36
        $region35: #{tpu_custom_call.1} parent=31 // pred_region
          %206 = dma.done %s199, 512
        $region36: #{tpu_custom_call.1} parent=31 // pred_fallthru
          _
        %p207 = pneg %p48
        %p208 = pneg %p45
        %s209 = smul.u32 2, %s25
        %p210 = scmp.lt.s32.totalorder %s24, 1
        %s211 = scalar_select %p210, %s24, 1
        %p212 = scmp.lt.s32.totalorder %s209, 1
        %s213 = scalar_select %p212, %s209, 1
        %s214 = smul.addr %s211, 2
        %s215 = sadd.s32 %s213, %s214
        %s216 = smul.addr %s215, 8
        %s217 = scalar_lea.vmem %s1, %s216
        %p218 = pneg %p76
        %p219 = pneg %p73
        %s220 = sand.u32 %s91, 1
        %s221 = scalar_lea.sflag [#allocation3], %s220
        %s222 = sand.u32 %s91, 1
        %s223 = smul.addr %s222, 32
        %s224 = scalar_lea.vmem [#allocation2], %s223
        %p225 = pneg %p104
        %p226 = pneg %p101
        %p227 = pneg %p132
        %p228 = pneg %p129
        %s229 = sand.u32 %s119, 1
        %s230 = scalar_lea.sflag [#allocation4], %s229
        %s231 = sand.u32 %s119, 1
        %s232 = smul.addr %s231, 32
        %s233 = scalar_lea.vmem [#allocation5], %s232
        %s234 = smul.u32 2, %s25
        %p235 = scmp.lt.s32.totalorder %s24, 1
        %s236 = scalar_select %p235, %s24, 1
        %p237 = scmp.lt.s32.totalorder %s234, 1
        %s238 = scalar_select %p237, %s234, 1
        %s239 = smul.addr %s236, 2
        %s240 = sadd.s32 %s238, %s239
        %s241 = smul.addr %s240, 8
        %s242 = scalar_lea.vmem %s1, %s241
        %s243 = smul.u32 2, %s25
        %s244 = smul.u32 2, %s25
        %s245 = smul.u32 2, %s25
        %v246 = vld [vmem:[%s202] sm:$0xff]
        %v247 = vld [vmem:[%s202 + $0x8] sm:$0xff]
        %v248 = vld [vmem:[%s202 + $0x10] sm:$0xff]
        %v249 = vld [vmem:[%s202 + $0x18] sm:$0xff]
        %v250 = vadd.f32 %v246, %v247
        %251 = vadd.xlane.f32.xlu0 %v250
        %v252 = vpop.xlane.xlu0 %251
        %v253 = vadd.f32 %v248, %v249
        %254 = vadd.xlane.f32.xlu0 %v253
        %v255 = vpop.xlane.xlu0 %254
        %v256 = vmul.f32 %v246, %v246
        %v257 = vmul.f32 %v247, %v247
        %v258 = vmul.f32 %v248, %v248
        %v259 = vmul.f32 %v249, %v249
        %v260 = vadd.f32 %v256, %v257
        %261 = vadd.xlane.f32.xlu0 %v260
        %v262 = vpop.xlane.xlu0 %261
        %v263 = vadd.f32 %v258, %v259
        %264 = vadd.xlane.f32.xlu0 %v263
        %v265 = vpop.xlane.xlu0 %264
        %vm266 = vcmask 7168
        %v267 = vsel %vm266, %v252, %v262
        %v268 = vsel %vm266, %v255, %v265
        %v269 = vld [vmem:[%s0] sm:$0xff]
        %v270 = vld [vmem:[%s0 + $0x8] sm:$0xff]
        %vm271 = vcmask 130048
        %v273 = vsel %vm271, %v269, 0
        %v276 = vsel %vm271, %v270, 0
        %278 = vmatprep.subr.mxu0 0.0
        %279 = vmatpush1.msra.mxu0 %v267
        %280 = vmatprep.subr.mxu0 0.0
        %281 = vmatpush1.msra.mxu0 %v268
        %282 = vmatprep.subr.mxu0 0.0
        %283 = vmatpush1.msra.mxu0 0.0
        %284 = vmatprep.subr.mxu0 0.0
        %285 = vmatpush1.msra.mxu0 0.0
        %286 = vmatprep.subr.mxu0 0.0
        %287 = vmatpush1.msra.mxu0 0.0
        %288 = vmatprep.subr.mxu0 0.0
        %289 = vmatpush1.msra.mxu0 0.0
        %290 = vmatprep.subr.mxu0 0.0
        %291 = vmatpush1.msra.mxu0 0.0
        %292 = vmatprep.subr.mxu0 0.0
        %293 = vmatpush1.msra.mxu0 0.0
        %294 = vmatprep.subr.mxu0 0.0
        %295 = vmatpush1.msra.mxu0 0.0
        %296 = vmatprep.subr.mxu0 0.0
        %297 = vmatpush1.msra.mxu0 0.0
        %298 = vmatprep.subr.mxu0 0.0
        %299 = vmatpush1.msra.mxu0 0.0
        %300 = vmatprep.subr.mxu0 0.0
        %301 = vmatpush1.msra.mxu0 0.0
        %302 = vmatprep.subr.mxu0 0.0
        %303 = vmatpush1.msra.mxu0 0.0
        %304 = vmatprep.subr.mxu0 0.0
        %305 = vmatpush1.msra.mxu0 0.0
        %306 = vmatprep.subr.mxu0 0.0
        %307 = vmatpush1.msra.mxu0 0.0
        %308 = vmatprep.subr.mxu0 0.0
        %309 = vmatpush1.msra.mxu0 0.0
        %310 = vmatprep.subr.mxu0 0.0
        %311 = vmatpush1.msra.mxu0 0.0
        %312 = vmatprep.subr.mxu0 0.0
        %313 = vmatpush1.msra.mxu0 0.0
        %314 = vmatprep.subr.mxu0 0.0
        %315 = vmatpush1.msra.mxu0 0.0
        %316 = vmatprep.subr.mxu0 0.0
        %317 = vmatpush1.msra.mxu0 0.0
        %318 = vmatprep.subr.mxu0 0.0
        %319 = vmatpush1.msra.mxu0 0.0
        %320 = vmatprep.subr.mxu0 0.0
        %321 = vmatpush1.msra.mxu0 0.0
        %322 = vmatprep.subr.mxu0 0.0
        %323 = vmatpush1.msra.mxu0 0.0
        %324 = vmatprep.subr.mxu0 0.0
        %325 = vmatpush1.msra.mxu0 0.0
        %326 = vmatprep.subr.mxu0 0.0
        %327 = vmatpush1.msra.mxu0 0.0
        %328 = vmatprep.subr.mxu0 0.0
        %329 = vmatpush1.msra.mxu0 0.0
        %330 = vmatprep.subr.mxu0 0.0
        %331 = vmatpush1.msra.mxu0 0.0
        %332 = vmatprep.subr.mxu0 0.0
        %333 = vmatpush1.msra.mxu0 0.0
        %334 = vmatprep.subr.mxu0 0.0
        %335 = vmatpush1.msra.mxu0 0.0
        %336 = vmatprep.subr.mxu0 0.0
        %337 = vmatpush1.msra.mxu0 0.0
        %338 = vmatprep.subr.mxu0 0.0
        %339 = vmatpush1.msra.mxu0 0.0
        %340 = vmatprep.subr.mxu0 0.0
        %341 = vmatpush1.msra.mxu0 0.0
        %342 = vmatprep.mubr.f32.mxu0 0.0
        %343 = vmatmul.mubr.f32.gmra.mrb[0].mxu0 %v273
        %v344 = vpop.f32.mrb[0].mxu0
        %v345 = vadd.f32 0.0, %v344
        %v346 = vpop.f32.mrb[0].mxu0
        %347 = vmatprep.mubr.f32.mxu0 0.0
        %348 = vmatmul.mubr.f32.gmra.mrb[0].mxu0 %v276
        %v349 = vpop.f32.mrb[0].mxu0
        %v350 = vadd.f32 0.0, %v349
        %v351 = vpop.f32.mrb[0].mxu0
        %352 = vdwg.mxu0
        %v353 = vmul.f32 %v345, %v345
        %v354 = vmul.f32 %v350, %v350
        %357 = vrot.lane.b32.xlu0 %v353, 1
        %v358 = vpop.permute.xlu0 %357
        %359 = vrot.lane.b32.xlu0 %v354, 1
        %v360 = vpop.permute.xlu0 %359
        %v363 = vsub.f32 %v345, %v358
        %v364 = vsub.f32 %v350, %v360
        %v365 = vmax.f32 %v363, 0.0
        %v366 = vmax.f32 %v364, 0.0
        %v367 = vadd.f32 %v365, 1e-05
        %v368 = vadd.f32 %v366, 1e-05
        %v369 = vrsqrt.pop %v367
        %v370 = vrsqrt.pop %v368
        %v371 = vld [vmem:[%s242] sm:$0xff]
        %v372 = vld [vmem:[%s242 + $0x8] sm:$0xff]
        %375 = vrot.lane.b32.xlu0 %v371, 1
        %v376 = vpop.permute.xlu0 %375
        %377 = vrot.lane.b32.xlu0 %v372, 1
        %v378 = vpop.permute.xlu0 %377
        %v381 = vmul.f32 %v369, %v376
        %v382 = vmul.f32 %v370, %v378
        %385 = vrot.lane.b32.xlu0 %v381, 127
        %v386 = vpop.permute.xlu0 %385
        %387 = vrot.lane.b32.xlu0 %v382, 127
        %v388 = vpop.permute.xlu0 %387
        %v391 = vmul.f32 %v345, %v386
        %v392 = vmul.f32 %v350, %v388
        %395 = vrot.lane.b32.xlu0 %v391, 1
        %v396 = vpop.permute.xlu0 %395
        %397 = vrot.lane.b32.xlu0 %v392, 1
        %v398 = vpop.permute.xlu0 %397
        %v401 = vsub.f32 %v371, %v396
        %v402 = vsub.f32 %v372, %v398
        %403 = vset.pattern.permute.xlu0 1
        %404 = vperm.xlu0 %403, %v381
        %v405 = vpop.permute.xlu0 %404
        %407 = vset.pattern.permute.xlu0 1
        %408 = vperm.xlu0 %407, %v382
        %v409 = vpop.permute.xlu0 %408
        %v411 = vmul.f32 %v246, %v405
        %v412 = vmul.f32 %v247, %v405
        %v413 = vmul.f32 %v248, %v409
        %v414 = vmul.f32 %v249, %v409
        %416 = vset.pattern.permute.xlu0 1
        %417 = vperm.xlu0 %416, %v401
        %v418 = vpop.permute.xlu0 %417
        %421 = vset.pattern.permute.xlu0 1
        %422 = vperm.xlu0 %421, %v402
        %v423 = vpop.permute.xlu0 %422
        %v425 = vadd.f32 %v411, %v418
        %v426 = vadd.f32 %v412, %v418
        %v427 = vadd.f32 %v413, %v423
        %v428 = vadd.f32 %v414, %v423
        %429 = vst [vmem:[%s233] sm:$0xff] %v425
        %430 = vst [vmem:[%s233 + $0x8] sm:$0xff] %v426
        %431 = vst [vmem:[%s233 + $0x10] sm:$0xff] %v427
        %432 = vst [vmem:[%s233 + $0x18] sm:$0xff] %v428
        %s433 = sand.u32 %s119, 1
        %s434 = scalar_lea.sflag [#allocation4], %s433
        %s435 = sand.u32 %s119, 1
        %s436 = smul.addr %s435, 32
        %s437 = scalar_lea.vmem [#allocation5], %s436
        // Predicated region
        $region37: #{tpu_custom_call.1} parent=31 // pred_check
          %p438 = pneg %p129
        $region38: #{tpu_custom_call.1} parent=31 // pred_check_branch
          %440 = sbr.rel (%p438) target = $region40
        $region39: #{tpu_custom_call.1} parent=31 // pred_region
          %s441 = smul.u32 2, %s25
          %s443 = ssub.s32 512, 512
          %444 = vsyncadd %s434, %s443
          %s445 = smul.addr %s441, 2
          %s446 = smul.addr %s24, 4
          %s447 = sadd.s32 %s445, %s446
          %s448 = smul.addr %s447, 128
          %s449 = scalar_lea.hbm %s3, %s448
          %s450 = sshll.u32 %s437, 4
          %s451 = int_to_ptr.vmem [resolvable:$true] %s450
          %456 = dma.vmem_to_hbm [thread:$0]  %s451, 512, %s449, %s434, 256, 256, 16
        $region40: #{tpu_custom_call.1} parent=31 // pred_fallthru
          _
      $region32: #{tpu_custom_call.1} parent=5 // pred_fallthru
        _
      %p457 = scmp.le.s32.totalorder 2, %s15
      // Predicated region
      $region41: #{tpu_custom_call.1} parent=5 // pred_check
        %p458 = pneg %p457
      $region42: #{tpu_custom_call.1} parent=5 // pred_check_branch
        %460 = sbr.rel (%p458) target = $region44
      $region43: #{tpu_custom_call.1} parent=5 // pred_region
        %s461 = ssub.s32 %s15, 2
        // Predicated region
        $region45: #{tpu_custom_call.1} parent=43 // pred_check
          %p462 = pneg %p135
        $region46: #{tpu_custom_call.1} parent=43 // pred_check_branch
          %464 = sbr.rel (%p462) target = $region48
        $region47: #{tpu_custom_call.1} parent=43 // pred_region
          %s465 = sand.u32 %s120, 1
          %s466 = scalar_lea.sflag [#allocation4], %s465
          %s467 = sand.u32 %s120, 1
          %s468 = smul.addr %s467, 32
          %s469 = scalar_lea.vmem [#allocation5], %s468
          %470 = dma.done %s466, 512
        $region48: #{tpu_custom_call.1} parent=43 // pred_fallthru
          _
      $region44: #{tpu_custom_call.1} parent=5 // pred_fallthru
        _
    $region6: #{tpu_custom_call.1} parent=1 // loop_footer
      %s19 = sadd.s32 1, %s15
    $region7: #{tpu_custom_call.1} parent=1 // loop_footer_branch
      %14 = sbr.rel target = $region3
    $region8: #{tpu_custom_call.1} parent=1 // loop_exit
      _
    %471 = vsyncpa [#allocation3], 1
    %s472 = scalar_lea.sflag [#allocation3], 1
    %473 = vsyncpa %s472, 1
    %474 = vsyncpa [#allocation4], 1
    %s475 = scalar_lea.sflag [#allocation4], 1
    %476 = vsyncpa %s475, 1

</llo_original>
